<compile_context>
chip_gen: v6e
topology: v6e:2x2x1
jax: 0.10.0
libtpu: 0.0.40
codegen_flags: <defaults>
</compile_context>

<pallas_src>
import jax
import jax.numpy as jnp
from jax.experimental import pallas as pl
from jax.experimental.pallas import tpu as pltpu


def _round_up(x, m):
    return (x + m - 1) // m * m


def _make_kernel(d_re, n_nodes):
    def kernel(src_ref, dst_ref, node_ref, out_ref, acc_ref):
        i = pl.program_id(1)

        @pl.when(i == 0)
        def _init():
            acc_ref[...] = jnp.zeros_like(acc_ref)

        node = node_ref[...].astype(jnp.float32)       # (D_node, N)
        idx_u = src_ref[...]                           # (1, TE) int32
        idx_v = dst_ref[...]
        te = idx_u.shape[1]

        # One-hot gather on the MXU: onehot[n, e] = (idx[e] == n).
        row = jax.lax.broadcasted_iota(jnp.int32, (n_nodes, te), 0)
        oh_u = (row == idx_u).astype(jnp.float32)      # (N, TE)
        oh_v = (row == idx_v).astype(jnp.float32)
        feat_u = jnp.dot(node, oh_u, preferred_element_type=jnp.float32)  # (D_node, TE)
        feat_v = jnp.dot(node, oh_v, preferred_element_type=jnp.float32)

        re_u, ir_u = feat_u[:d_re], feat_u[d_re:]
        re_v, ir_v = feat_v[:d_re], feat_v[d_re:]

        # u_dot_v('re_','re_') -> agree ; u_sub_v('ir_h','ir_h') -> diff
        agree = jnp.sum(re_u * re_v, axis=0, keepdims=True)     # (1, TE)
        diff = ir_u - ir_v
        sq = jnp.sum(diff * diff, axis=0, keepdims=True)        # (1, TE)
        acc_ref[...] += (1.0 - agree) * sq

        @pl.when(i == pl.num_programs(1) - 1)
        def _finalize():
            total = jnp.sum(acc_ref[...])
            r = jax.lax.broadcasted_iota(jnp.int32, out_ref.shape, 0)
            c = jax.lax.broadcasted_iota(jnp.int32, out_ref.shape, 1)
            out_ref[...] = jnp.where((r == 0) & (c == 0), total, 0.0)

    return kernel


def ir_consistency_loss(src, dst, re_, ir_h, *, tile_e=1024, num_splits=2):
    """src/dst: (E,) int edge endpoints; re_: (N, D_re); ir_h: (N, D_ir)."""
    E = int(src.shape[0])
    n_nodes, d_re = re_.shape
    d_ir = ir_h.shape[1]
    d_node = d_re + d_ir

    # Edge tile: multiple of 128 lanes; small problems -> one step per split.
    tile = min(tile_e, _round_up(pl.cdiv(E, num_splits), 128))
    e_pad = _round_up(E, num_splits * tile)
    n_tiles = e_pad // (num_splits * tile)

    # Pad with self-edges (0 -> 0): diff == 0, so padded edges contribute 0.
    pad = e_pad - E
    src_p = jnp.pad(jnp.asarray(src, jnp.int32), (0, pad)).reshape(1, e_pad)
    dst_p = jnp.pad(jnp.asarray(dst, jnp.int32), (0, pad)).reshape(1, e_pad)

    # Packed, transposed node table: features on sublanes, nodes on lanes.
    # Streamed in its native dtype; cast to f32 inside the kernel.
    node_t = jnp.concatenate([re_, ir_h], axis=1).T             # (D_node, N)

    edge_kw = dict(pipeline_mode=pl.Buffered(3)) if n_tiles >= 3 else {}

    def make_edge_spec():
        return pl.BlockSpec((1, tile), lambda c, i: (0, c * n_tiles + i),
                            **edge_kw)

    cost = pl.CostEstimate(
        flops=int(e_pad * (4 * d_node * n_nodes + 2 * d_re + 3 * d_ir + 3)),
        transcendentals=0,
        bytes_accessed=int(e_pad * 8
                           + node_t.size * node_t.dtype.itemsize
                           + num_splits * 8 * 128 * 4),
    )

    partials = pl.pallas_call(
        _make_kernel(d_re, n_nodes),
        out_shape=jax.ShapeDtypeStruct((num_splits * 8, 128), jnp.float32),
        grid_spec=pltpu.PrefetchScalarGridSpec(
            num_scalar_prefetch=0,
            grid=(num_splits, n_tiles),
            in_specs=[
                make_edge_spec(),                                    # src
                make_edge_spec(),                                    # dst
                pl.BlockSpec((d_node, n_nodes), lambda c, i: (0, 0)),  # node tbl
            ],
            out_specs=pl.BlockSpec((8, 128), lambda c, i: (c, 0)),
            scratch_shapes=[pltpu.VMEM((1, tile), jnp.float32)],
        ),
        compiler_params=pltpu.CompilerParams(
            dimension_semantics=("parallel", "arbitrary")),
        cost_estimate=cost,
    )(src_p, dst_p, node_t)

    # lap_loss.mean() over the E real edges (padded self-edges contribute 0).
    return jnp.sum(partials) / jnp.float32(E)


def _reference_loss(src, dst, re_, ir_h):
    agree = jnp.sum(re_[src] * re_[dst], axis=1, keepdims=True)
    diff = ir_h[src] - ir_h[dst]
    lap = (1.0 - agree) * jnp.sum(diff * diff, axis=1, keepdims=True)
    return jnp.mean(lap)


if __name__ == "__main__":
    key = jax.random.PRNGKey(0)
    k1, k2, k3, k4 = jax.random.split(key, 4)

    N = 16          # number of graph nodes
    E = 64          # number of edges
    D_RE = 8        # dim of 're_' node feature (class probabilities)
    D_IR = 32       # dim of 'ir_h' node feature (hidden representation)

    # Deterministic synthetic graph (src/dst endpoint indices per edge).
    src = jax.random.randint(k1, (E,), 0, N, dtype=jnp.int32)
    dst = jax.random.randint(k2, (E,), 0, N, dtype=jnp.int32)

    re_ = jax.nn.softmax(jax.random.normal(k3, (N, D_RE), jnp.float32), axis=-1)
    ir_h = jax.random.normal(k4, (N, D_IR), jnp.float32)

    loss_fn = jax.jit(ir_consistency_loss)
    loss = jax.block_until_ready(loss_fn(src, dst, re_, ir_h))
    ref = jax.block_until_ready(_reference_loss(src, dst, re_, ir_h))
    assert jnp.allclose(loss, ref, rtol=1e-5, atol=1e-5), (loss, ref)

    print("KERNEL_OK")
</pallas_src>

<mosaic_0001>
module attributes {stable_mosaic.version = 11 : i64} {
  func.func @kernel(%arg0: i32, %arg1: i32, %arg2: memref<1x128xi32, #tpu.memory_space<vmem>>, %arg3: memref<1x128xi32, #tpu.memory_space<vmem>>, %arg4: memref<40x16xf32, #tpu.memory_space<vmem>>, %arg5: memref<8x128xf32, #tpu.memory_space<vmem>>, %arg6: memref<1x128xf32, #tpu.memory_space<vmem>>) attributes {dimension_semantics = [#tpu.dimension_semantics<parallel>, #tpu.dimension_semantics<arbitrary>], iteration_bounds = array<i64: 2, 1>, scalar_prefetch = 0 : i64, scratch_operands = 1 : i64, tpu.core_type = #tpu.core_type<tc>, window_params = [{transform_indices = @transform_0, window_bounds = array<i64: 1, 128>}, {transform_indices = @transform_1, window_bounds = array<i64: 1, 128>}, {pipeline_mode = #tpu.pipeline_mode<synchronous>, transform_indices = @transform_2, window_bounds = array<i64: 40, 16>}, {transform_indices = @transform_3, window_bounds = array<i64: 8, 128>}]} {
    %c0_i32 = arith.constant 0 : i32
    %0 = arith.cmpi eq, %arg1, %c0_i32 : i32
    %1 = arith.extui %0 : i1 to i32
    %c0_i32_0 = arith.constant 0 : i32
    %2 = arith.cmpi ne, %1, %c0_i32_0 : i32
    scf.if %2 {
      %cst_16 = arith.constant 0.000000e+00 : f32
      %37 = vector.broadcast %cst_16 : f32 to vector<1x128xf32>
      %c0_17 = arith.constant 0 : index
      %c0_18 = arith.constant 0 : index
      %38 = vector.load %arg6[%c0_17, %c0_18] : memref<1x128xf32, #tpu.memory_space<vmem>>, vector<1x128xf32>
      tpu.vector_store %arg6[%c0_17, %c0_18], %37 {strides = array<i32>} : memref<1x128xf32, #tpu.memory_space<vmem>>, vector<1x128xf32>,
    } else {
    }
    %c0 = arith.constant 0 : index
    %c0_1 = arith.constant 0 : index
    %3 = vector.load %arg4[%c0, %c0_1] : memref<40x16xf32, #tpu.memory_space<vmem>>, vector<40x16xf32>
    %c0_2 = arith.constant 0 : index
    %c0_3 = arith.constant 0 : index
    %4 = vector.load %arg2[%c0_2, %c0_3] : memref<1x128xi32, #tpu.memory_space<vmem>>, vector<1x128xi32>
    %c0_4 = arith.constant 0 : index
    %c0_5 = arith.constant 0 : index
    %5 = vector.load %arg3[%c0_4, %c0_5] : memref<1x128xi32, #tpu.memory_space<vmem>>, vector<1x128xi32>
    %6 = tpu.iota {dimensions = array<i32: 0>} : vector<16x128xi32>
    %7 = vector.broadcast %4 : vector<1x128xi32> to vector<16x128xi32>
    %8 = arith.cmpi eq, %6, %7 : vector<16x128xi32>
    %9 = arith.extui %8 : vector<16x128xi1> to vector<16x128xi32>
    %10 = arith.sitofp %9 : vector<16x128xi32> to vector<16x128xf32>
    %11 = vector.broadcast %5 : vector<1x128xi32> to vector<16x128xi32>
    %12 = arith.cmpi eq, %6, %11 : vector<16x128xi32>
    %13 = arith.extui %12 : vector<16x128xi1> to vector<16x128xi32>
    %14 = arith.sitofp %13 : vector<16x128xi32> to vector<16x128xf32>
    %cst = arith.constant dense<0.000000e+00> : vector<40x128xf32>
    %15 = tpu.matmul %3, %10, %cst {dimension_numbers = #tpu.dot_dimension_numbers<[1], [0], [0], [1], [0, 0, 1, 1], [], []>} : vector<40x16xf32>, vector<16x128xf32>, vector<40x128xf32> -> vector<40x128xf32>
    %cst_6 = arith.constant dense<0.000000e+00> : vector<40x128xf32>
    %16 = tpu.matmul %3, %14, %cst_6 {dimension_numbers = #tpu.dot_dimension_numbers<[1], [0], [0], [1], [0, 0, 1, 1], [], []>} : vector<40x16xf32>, vector<16x128xf32>, vector<40x128xf32> -> vector<40x128xf32>
    %17 = vector.extract_strided_slice %15 {offsets = [0, 0], sizes = [8, 128], strides = [1, 1]} : vector<40x128xf32> to vector<8x128xf32>
    %18 = vector.extract_strided_slice %15 {offsets = [8, 0], sizes = [32, 128], strides = [1, 1]} : vector<40x128xf32> to vector<32x128xf32>
    %19 = vector.extract_strided_slice %16 {offsets = [0, 0], sizes = [8, 128], strides = [1, 1]} : vector<40x128xf32> to vector<8x128xf32>
    %20 = vector.extract_strided_slice %16 {offsets = [8, 0], sizes = [32, 128], strides = [1, 1]} : vector<40x128xf32> to vector<32x128xf32>
    %21 = arith.mulf %17, %19 : vector<8x128xf32>
    %cst_7 = arith.constant dense<0.000000e+00> : vector<128xf32>
    %22 = vector.multi_reduction <add>, %21, %cst_7 [0] : vector<8x128xf32> to vector<128xf32>
    %23 = vector.shape_cast %22 : vector<128xf32> to vector<1x128xf32>
    %24 = arith.subf %18, %20 : vector<32x128xf32>
    %25 = arith.mulf %24, %24 : vector<32x128xf32>
    %cst_8 = arith.constant dense<0.000000e+00> : vector<128xf32>
    %26 = vector.multi_reduction <add>, %25, %cst_8 [0] : vector<32x128xf32> to vector<128xf32>
    %27 = vector.shape_cast %26 : vector<128xf32> to vector<1x128xf32>
    %c0_9 = arith.constant 0 : index
    %c0_10 = arith.constant 0 : index
    %28 = vector.load %arg6[%c0_9, %c0_10] : memref<1x128xf32, #tpu.memory_space<vmem>>, vector<1x128xf32>
    %cst_11 = arith.constant 1.000000e+00 : f32
    %29 = vector.broadcast %cst_11 : f32 to vector<1x128xf32>
    %30 = arith.subf %29, %23 : vector<1x128xf32>
    %31 = arith.mulf %30, %27 : vector<1x128xf32>
    %32 = arith.addf %28, %31 : vector<1x128xf32>
    %c0_12 = arith.constant 0 : index
    %c0_13 = arith.constant 0 : index
    %33 = vector.load %arg6[%c0_12, %c0_13] : memref<1x128xf32, #tpu.memory_space<vmem>>, vector<1x128xf32>
    tpu.vector_store %arg6[%c0_12, %c0_13], %32 {strides = array<i32>} : memref<1x128xf32, #tpu.memory_space<vmem>>, vector<1x128xf32>,
    %c0_i32_14 = arith.constant 0 : i32
    %34 = arith.cmpi eq, %arg1, %c0_i32_14 : i32
    %35 = arith.extui %34 : i1 to i32
    %c0_i32_15 = arith.constant 0 : i32
    %36 = arith.cmpi ne, %35, %c0_i32_15 : i32
    scf.if %36 {
      %c0_16 = arith.constant 0 : index
      %c0_17 = arith.constant 0 : index
      %37 = vector.load %arg6[%c0_16, %c0_17] : memref<1x128xf32, #tpu.memory_space<vmem>>, vector<1x128xf32>
      %38 = vector.shape_cast %37 : vector<1x128xf32> to vector<1x1x128xf32>
      %cst_18 = arith.constant dense<0.000000e+00> : vector<1xf32>
      %39 = vector.multi_reduction <add>, %38, %cst_18 [1, 2] : vector<1x1x128xf32> to vector<1xf32>
      %40 = vector.shape_cast %39 : vector<1xf32> to vector<1x1x1xf32>
      %41 = vector.extract %40[0, 0, 0] : f32 from vector<1x1x1xf32>
      %42 = tpu.iota {dimensions = array<i32: 0>} : vector<8x128xi32>
      %43 = tpu.iota {dimensions = array<i32: 1>} : vector<8x128xi32>
      %c0_i32_19 = arith.constant 0 : i32
      %44 = vector.broadcast %c0_i32_19 : i32 to vector<8x128xi32>
      %45 = arith.cmpi eq, %42, %44 : vector<8x128xi32>
      %c0_i32_20 = arith.constant 0 : i32
      %46 = vector.broadcast %c0_i32_20 : i32 to vector<8x128xi32>
      %47 = arith.cmpi eq, %43, %46 : vector<8x128xi32>
      %48 = arith.andi %45, %47 : vector<8x128xi1>
      %cst_21 = arith.constant 0.000000e+00 : f32
      %49 = vector.broadcast %41 : f32 to vector<8x128xf32>
      %50 = vector.broadcast %cst_21 : f32 to vector<8x128xf32>
      %51 = arith.select %48, %49, %50 : vector<8x128xi1>, vector<8x128xf32>
      %c0_22 = arith.constant 0 : index
      %c0_23 = arith.constant 0 : index
      %52 = vector.load %arg5[%c0_22, %c0_23] : memref<8x128xf32, #tpu.memory_space<vmem>>, vector<8x128xf32>
      tpu.vector_store %arg5[%c0_22, %c0_23], %51 {strides = array<i32>} : memref<8x128xf32, #tpu.memory_space<vmem>>, vector<8x128xf32>,
    } else {
    }
    return
  }
  func.func @transform_0(%arg0: i32, %arg1: i32) -> (i32, i32) {
    %c1_i32 = arith.constant 1 : i32
    %0 = arith.muli %arg0, %c1_i32 : i32
    %1 = arith.addi %0, %arg1 : i32
    %c0_i32 = arith.constant 0 : i32
    %c0_i32_0 = arith.constant 0 : i32
    return %c0_i32, %1 : i32, i32
  }
  func.func @transform_1(%arg0: i32, %arg1: i32) -> (i32, i32) {
    %c1_i32 = arith.constant 1 : i32
    %0 = arith.muli %arg0, %c1_i32 : i32
    %1 = arith.addi %0, %arg1 : i32
    %c0_i32 = arith.constant 0 : i32
    %c0_i32_0 = arith.constant 0 : i32
    return %c0_i32, %1 : i32, i32
  }
  func.func @transform_2(%arg0: i32, %arg1: i32) -> (i32, i32) {
    %c0_i32 = arith.constant 0 : i32
    %c0_i32_0 = arith.constant 0 : i32
    %c0_i32_1 = arith.constant 0 : i32
    return %c0_i32, %c0_i32_0 : i32, i32
  }
  func.func @transform_3(%arg0: i32, %arg1: i32) -> (i32, i32) {
    %c0_i32 = arith.constant 0 : i32
    %c0_i32_0 = arith.constant 0 : i32
    return %arg0, %c0_i32 : i32, i32
  }
}

</mosaic_0001>

<llo_original>
// kernel: ir_consistency_loss.1
$region0: #{ir_consistency_loss.1}
  #allocation0 [shape = 'u32[]', space=smem, size = 0x4, offset = 0x4, fixed_abs, tag = 'smem constant byte address 0x4 - core index']
  #allocation1 [shape = 'u32[144,128]{1,0:T(1,128)}', space=vmem, size = 0x12000, scoped, tag = 'internal scratch']
  #allocation2 [shape = 'f32[1,128]{1,0:T(1,128)}', space=vmem, size = 0x200, scoped, tag = 'scratch operand']
  %s0 = inlined_call_operand.vmem [shape: s32[1,256], index: 0, kind: input, shape index: {}]
  %s1 = inlined_call_operand.vmem [shape: s32[1,256], index: 1, kind: input, shape index: {}]
  %s2 = inlined_call_operand.vmem [shape: f32[40,16], index: 2, kind: input, shape index: {}]
  %s3 = inlined_call_operand.vmem [shape: f32[16,128], index: 3, kind: output, shape index: {}]
  %s4 = sld [smem:[#allocation0]]
  $region53: #{ir_consistency_loss.1} parent=0
    _
  %s6 = ssub.s32 1, %s4
  %s7 = scalar_select 0, %s6, %s4
  loop: start=0, step=1, limit=4
  $region2: #{ir_consistency_loss.1} parent=0 // loop_pre_header
    _
  $region3: #{ir_consistency_loss.1} parent=0 // loop_header
    %s9 = sphi 0, %s13
    %p10 = scmp.ge.s32.totalorder %s9, 4
    %s16 = sphi 0, %s28
    %s17 = sphi 0, %s24
    %s18 = sphi 0, %s16
    %s19 = sphi 0, %s17
    %s20 = sphi 0, %s18
    %s21 = sphi 0, %s19
    %s33 = sphi 0, %s35
    %s36 = sphi 0, %s33
    %s37 = sphi 0, %s36
    %s53 = sphi 0, %s37
    %s61 = sphi 0, %s63
    %s64 = sphi 0, %s61
    %s65 = sphi 0, %s64
    %s81 = sphi 0, %s65
    %s85 = sphi 0, %s85
    %s87 = sphi 0, %s85
    %s88 = sphi 0, %s87
    %s102 = sphi 0, %s88
    %s108 = sphi 0, %s110
    %s111 = sphi 0, %s108
    %s112 = sphi 0, %s111
    %s128 = sphi 0, %s112
  $region4: #{ir_consistency_loss.1} parent=0 // loop_header_branch
    %12 = sbr.rel (%p10) target = $region8
  $region5: #{ir_consistency_loss.1} parent=0 // loop_body
    %s14 = ssub.s32 %s9, 1
    %s15 = ssub.s32 %s9, 2
    %s22 = sadd.s32 1, %s17
    %p23 = scmp.ge.s32.totalorder %s22, 1
    %s24 = scalar_select %p23, 0, %s22
    %s25 = sadd.s32 1, %s16
    %s26 = scalar_select %p23, %s25, %s16
    %p27 = scmp.ge.s32.totalorder %s26, 2
    %s28 = scalar_select %p27, 0, %s26
    %s29 = sadd.s32 %s16, %s17
    %s30 = sadd.s32 %s28, %s24
    %s31 = ssub.s32 %s29, %s30
    %p32 = scmp.eq.s32.totalorder %s31, 0
    %s34 = sadd.s32 %s33, 1
    %s35 = scalar_select %p32, %s33, %s34
    %p38 = pneg %p32
    %p39 = scmp.eq.s32.totalorder %s9, 1
    %p40 = por %p38, %p39
    %p41 = scmp.ne.s32.totalorder %s33, %s36
    %p42 = scmp.eq.s32.totalorder %s9, 0
    %p43 = por %p41, %p42
    %p44 = scmp.ne.s32.totalorder %s33, %s36
    %p45 = scmp.eq.s32.totalorder %s14, 1
    %p46 = por %p44, %p45
    %p47 = scmp.ne.s32.totalorder %s36, %s37
    %p48 = scmp.eq.s32.totalorder %s14, 0
    %p49 = por %p47, %p48
    %p50 = scmp.ne.s32.totalorder %s36, %s37
    %p51 = scmp.eq.s32.totalorder %s15, 1
    %p52 = por %p50, %p51
    %p54 = scmp.ne.s32.totalorder %s37, %s53
    %p55 = scmp.eq.s32.totalorder %s15, 0
    %p56 = por %p54, %p55
    %s57 = sadd.s32 %s16, %s17
    %s58 = sadd.s32 %s28, %s24
    %s59 = ssub.s32 %s57, %s58
    %p60 = scmp.eq.s32.totalorder %s59, 0
    %s62 = sadd.s32 %s61, 1
    %s63 = scalar_select %p60, %s61, %s62
    %p66 = pneg %p60
    %p67 = scmp.eq.s32.totalorder %s9, 1
    %p68 = por %p66, %p67
    %p69 = scmp.ne.s32.totalorder %s61, %s64
    %p70 = scmp.eq.s32.totalorder %s9, 0
    %p71 = por %p69, %p70
    %p72 = scmp.ne.s32.totalorder %s61, %s64
    %p73 = scmp.eq.s32.totalorder %s14, 1
    %p74 = por %p72, %p73
    %p75 = scmp.ne.s32.totalorder %s64, %s65
    %p76 = scmp.eq.s32.totalorder %s14, 0
    %p77 = por %p75, %p76
    %p78 = scmp.ne.s32.totalorder %s64, %s65
    %p79 = scmp.eq.s32.totalorder %s15, 1
    %p80 = por %p78, %p79
    %p82 = scmp.ne.s32.totalorder %s65, %s81
    %p83 = scmp.eq.s32.totalorder %s15, 0
    %p84 = por %p82, %p83
    %s86 = sadd.s32 %s85, 1
    %p89 = scmp.eq.s32.totalorder %s9, 1
    %p90 = scmp.ne.s32.totalorder %s85, %s87
    %p91 = scmp.eq.s32.totalorder %s9, 0
    %p92 = por %p90, %p91
    %p93 = scmp.ne.s32.totalorder %s85, %s87
    %p94 = scmp.eq.s32.totalorder %s14, 1
    %p95 = por %p93, %p94
    %p96 = scmp.ne.s32.totalorder %s87, %s88
    %p97 = scmp.eq.s32.totalorder %s14, 0
    %p98 = por %p96, %p97
    %p99 = scmp.ne.s32.totalorder %s87, %s88
    %p100 = scmp.eq.s32.totalorder %s15, 1
    %p101 = por %p99, %p100
    %p103 = scmp.ne.s32.totalorder %s88, %s102
    %p104 = scmp.eq.s32.totalorder %s15, 0
    %p105 = por %p103, %p104
    %s106 = ssub.s32 %s16, %s28
    %p107 = scmp.eq.s32.totalorder %s106, 0
    %s109 = sadd.s32 %s108, 1
    %s110 = scalar_select %p107, %s108, %s109
    %p113 = pneg %p107
    %p114 = scmp.eq.s32.totalorder %s9, 1
    %p115 = por %p113, %p114
    %p116 = scmp.ne.s32.totalorder %s108, %s111
    %p117 = scmp.eq.s32.totalorder %s9, 0
    %p118 = por %p116, %p117
    %p119 = scmp.ne.s32.totalorder %s108, %s111
    %p120 = scmp.eq.s32.totalorder %s14, 1
    %p121 = por %p119, %p120
    %p122 = scmp.ne.s32.totalorder %s111, %s112
    %p123 = scmp.eq.s32.totalorder %s14, 0
    %p124 = por %p122, %p123
    %p125 = scmp.ne.s32.totalorder %s111, %s112
    %p126 = scmp.eq.s32.totalorder %s15, 1
    %p127 = por %p125, %p126
    %p129 = scmp.ne.s32.totalorder %s112, %s128
    %p130 = scmp.eq.s32.totalorder %s15, 0
    %p131 = por %p129, %p130
    %p132 = scmp.le.s32.totalorder 1, %s9
    %p133 = scmp.lt.s32.totalorder %s9, 3
    %p134 = pnand %p132, %p133
    %p135 = pneg %p134
    // Predicated region
    $region9: #{ir_consistency_loss.1} parent=5 // pred_check
      _
    $region10: #{ir_consistency_loss.1} parent=5 // pred_check_branch
      %137 = sbr.rel (%p134) target = $region12
    $region11: #{ir_consistency_loss.1} parent=5 // pred_region
      %s138 = ssub.s32 %s9, 1
      // Predicated region
      $region13: #{ir_consistency_loss.1} parent=11 // pred_check
        %p139 = pneg %p98
      $region14: #{ir_consistency_loss.1} parent=11 // pred_check_branch
        %141 = sbr.rel (%p139) target = $region16
      $region15: #{ir_consistency_loss.1} parent=11 // pred_region
        _
      $region16: #{ir_consistency_loss.1} parent=11 // pred_fallthru
        _
    $region12: #{ir_consistency_loss.1} parent=5 // pred_fallthru
      _
    %p142 = scmp.lt.s32.totalorder %s9, 2
    // Predicated region
    $region17: #{ir_consistency_loss.1} parent=5 // pred_check
      %p143 = pneg %p142
    $region18: #{ir_consistency_loss.1} parent=5 // pred_check_branch
      %145 = sbr.rel (%p143) target = $region20
    $region19: #{ir_consistency_loss.1} parent=5 // pred_region
      // Predicated region
      $region21: #{ir_consistency_loss.1} parent=19 // pred_check
        %p146 = pneg %p43
      $region22: #{ir_consistency_loss.1} parent=19 // pred_check_branch
        %148 = sbr.rel (%p146) target = $region24
      $region23: #{ir_consistency_loss.1} parent=19 // pred_region
        %s149 = sadd.s32 %s16, %s17
        %p150 = scmp.lt.s32.totalorder %s149, 1
        %s151 = scalar_select %p150, %s149, 1
        %s152 = scalar_lea.vmem %s0, %s151
        %s153 = sadd.s32 %s16, %s17
      $region24: #{ir_consistency_loss.1} parent=19 // pred_fallthru
        _
      // Predicated region
      $region25: #{ir_consistency_loss.1} parent=19 // pred_check
        %p154 = pneg %p71
      $region26: #{ir_consistency_loss.1} parent=19 // pred_check_branch
        %156 = sbr.rel (%p154) target = $region28
      $region27: #{ir_consistency_loss.1} parent=19 // pred_region
        %s157 = sadd.s32 %s16, %s17
        %p158 = scmp.lt.s32.totalorder %s157, 1
        %s159 = scalar_select %p158, %s157, 1
        %s160 = scalar_lea.vmem %s1, %s159
        %s161 = sadd.s32 %s16, %s17
      $region28: #{ir_consistency_loss.1} parent=19 // pred_fallthru
        _
    $region20: #{ir_consistency_loss.1} parent=5 // pred_fallthru
      _
    %p162 = scmp.le.s32.totalorder 1, %s9
    %p163 = scmp.lt.s32.totalorder %s9, 3
    %p164 = pnand %p162, %p163
    %p165 = pneg %p164
    // Predicated region
    $region29: #{ir_consistency_loss.1} parent=5 // pred_check
      _
    $region30: #{ir_consistency_loss.1} parent=5 // pred_check_branch
      %167 = sbr.rel (%p164) target = $region32
    $region31: #{ir_consistency_loss.1} parent=5 // pred_region
      %s168 = ssub.s32 %s9, 1
      %s169 = sadd.s32 %s18, %s19
      %p170 = scmp.lt.s32.totalorder %s169, 1
      %s171 = scalar_select %p170, %s169, 1
      %s172 = scalar_lea.vmem %s0, %s171
      %p173 = pneg %p49
      %p174 = pneg %p46
      %s175 = sadd.s32 %s18, %s19
      %p176 = scmp.lt.s32.totalorder %s175, 1
      %s177 = scalar_select %p176, %s175, 1
      %s178 = scalar_lea.vmem %s1, %s177
      %p179 = pneg %p77
      %p180 = pneg %p74
      %p181 = pneg %p98
      %p182 = pneg %p95
      %p183 = pneg %p124
      %p184 = pneg %p121
      %p185 = scmp.lt.s32.totalorder %s18, 1
      %s186 = scalar_select %p185, %s18, 1
      %s187 = smul.addr %s186, 8
      %s188 = scalar_lea.vmem %s3, %s187
      %s189 = sadd.s32 %s18, %s19
      %p190 = scmp.lt.s32.totalorder %s189, 1
      %s191 = scalar_select %p190, %s189, 1
      %s192 = scalar_lea.vmem %s0, %s191
      %s193 = sadd.s32 %s18, %s19
      %s194 = sadd.s32 %s18, %s19
      %p195 = scmp.lt.s32.totalorder %s194, 1
      %s196 = scalar_select %p195, %s194, 1
      %s197 = scalar_lea.vmem %s1, %s196
      %s198 = sadd.s32 %s18, %s19
      %p199 = scmp.lt.s32.totalorder %s18, 1
      %s200 = scalar_select %p199, %s18, 1
      %s201 = smul.addr %s200, 8
      %s202 = scalar_lea.vmem %s3, %s201
      %p203 = scmp.eq.s32.totalorder %s19, 0
      // Predicated region
      $region33: #{ir_consistency_loss.1} parent=31 // pred_check
        %p204 = pneg %p203
      $region34: #{ir_consistency_loss.1} parent=31 // pred_check_branch
        %206 = sbr.rel (%p204) target = $region36
      $region35: #{ir_consistency_loss.1} parent=31 // pred_region
        %207 = vst [vmem:[#allocation2] sm:$0x1] 0.0
      $region36: #{ir_consistency_loss.1} parent=31 // pred_fallthru
        _
      %v208 = vld [vmem:[%s2] sm:$0xff]
      %v209 = vld [vmem:[%s2 + $0x8] sm:$0xff]
      %v210 = vld [vmem:[%s2 + $0x10] sm:$0xff]
      %v211 = vld [vmem:[%s2 + $0x18] sm:$0xff]
      %v212 = vld [vmem:[%s2 + $0x20] sm:$0xff]
      %v213 = vld [vmem:[%s192] sm:$0x1]
      %v214 = vld [vmem:[%s197] sm:$0x1]
      %v215 = vlaneseq
      %v216 = vshrl.u32 %v215, 7
      %v217 = vadd.s32 %v216, 8
      %v218 = vlaneseq
      %v219 = vshrl.u32 %v218, 7
      %v220 = vsub.s32 0, %v219
      %v221 = vrot.slane %v213, %v220
      %vm222 = vcmp.eq.s32.totalorder %v216, %v221
      %vm223 = vcmp.eq.s32.totalorder %v217, %v221
      %v224 = vsel %vm222, 1, 0
      %v225 = vsel %vm223, 1, 0
      %v226 = vcvt.s32.f32 %v224
      %v227 = vcvt.s32.f32 %v225
      %v228 = vlaneseq
      %v229 = vshrl.u32 %v228, 7
      %v230 = vsub.s32 0, %v229
      %v231 = vrot.slane %v214, %v230
      %vm232 = vcmp.eq.s32.totalorder %v216, %v231
      %vm233 = vcmp.eq.s32.totalorder %v217, %v231
      %v234 = vsel %vm232, 1, 0
      %v235 = vsel %vm233, 1, 0
      %v236 = vcvt.s32.f32 %v234
      %v237 = vcvt.s32.f32 %v235
      %vm238 = vcmask 130048
      %v240 = vsel %vm238, %v208, 0
      %v243 = vsel %vm238, %v209, 0
      %v246 = vsel %vm238, %v210, 0
      %v249 = vsel %vm238, %v211, 0
      %v252 = vsel %vm238, %v212, 0
      %254 = vmatprep.subr.mxu0 0.0
      %255 = vmatpush1.msra.mxu0 0.0
      %256 = vmatprep.subr.mxu0 0.0
      %257 = vmatpush1.msra.mxu0 0.0
      %258 = vmatprep.subr.mxu0 0.0
      %259 = vmatpush1.msra.mxu0 0.0
      %260 = vmatprep.subr.mxu0 0.0
      %261 = vmatpush1.msra.mxu0 0.0
      %262 = vmatprep.subr.mxu0 0.0
      %263 = vmatpush1.msra.mxu0 0.0
      %264 = vmatprep.subr.mxu0 0.0
      %265 = vmatpush1.msra.mxu0 0.0
      %266 = vmatprep.subr.mxu0 0.0
      %267 = vmatpush1.msra.mxu0 0.0
      %268 = vmatprep.subr.mxu0 0.0
      %269 = vmatpush1.msra.mxu0 0.0
      %270 = vmatprep.subr.mxu0 0.0
      %271 = vmatpush1.msra.mxu0 0.0
      %272 = vmatprep.subr.mxu0 0.0
      %273 = vmatpush1.msra.mxu0 0.0
      %274 = vmatprep.subr.mxu0 0.0
      %275 = vmatpush1.msra.mxu0 0.0
      %276 = vmatprep.subr.mxu0 0.0
      %277 = vmatpush1.msra.mxu0 0.0
      %278 = vmatprep.subr.mxu0 0.0
      %279 = vmatpush1.msra.mxu0 0.0
      %280 = vmatprep.subr.mxu0 0.0
      %281 = vmatpush1.msra.mxu0 0.0
      %282 = vmatprep.subr.mxu0 0.0
      %283 = vmatpush1.msra.mxu0 %v227
      %284 = vmatprep.subr.mxu0 0.0
      %285 = vmatpush1.msra.mxu0 %v226
      %286 = vmatprep.subr.mxu0 0.0
      %287 = vmatpush2.msra.mxu0 0.0
      %288 = vmatprep.subr.mxu0 0.0
      %289 = vmatpush2.msra.mxu0 0.0
      %290 = vmatprep.subr.mxu0 0.0
      %291 = vmatpush2.msra.mxu0 0.0
      %292 = vmatprep.subr.mxu0 0.0
      %293 = vmatpush2.msra.mxu0 0.0
      %294 = vmatprep.subr.mxu0 0.0
      %295 = vmatpush2.msra.mxu0 0.0
      %296 = vmatprep.subr.mxu0 0.0
      %297 = vmatpush2.msra.mxu0 0.0
      %298 = vmatprep.subr.mxu0 0.0
      %299 = vmatpush2.msra.mxu0 0.0
      %300 = vmatprep.subr.mxu0 0.0
      %301 = vmatpush2.msra.mxu0 0.0
      %302 = vmatprep.subr.mxu0 0.0
      %303 = vmatpush2.msra.mxu0 0.0
      %304 = vmatprep.subr.mxu0 0.0
      %305 = vmatpush2.msra.mxu0 0.0
      %306 = vmatprep.subr.mxu0 0.0
      %307 = vmatpush2.msra.mxu0 0.0
      %308 = vmatprep.subr.mxu0 0.0
      %309 = vmatpush2.msra.mxu0 0.0
      %310 = vmatprep.subr.mxu0 0.0
      %311 = vmatpush2.msra.mxu0 0.0
      %312 = vmatprep.subr.mxu0 0.0
      %313 = vmatpush2.msra.mxu0 0.0
      %314 = vmatprep.subr.mxu0 0.0
      %315 = vmatpush2.msra.mxu0 0.0
      %316 = vmatprep.subr.mxu0 0.0
      %317 = vmatpush2.msra.mxu0 0.0
      %318 = vmatprep.mubr.f32.mxu0 0.0
      %319 = vmatmul.mubr.f32.gmra.mxu0 %v240
      %v320 = vpop.f32.mrf.mxu0
      %v321 = vadd.f32 0.0, %v320
      %v322 = vpop.f32.mrf.mxu0
      %323 = vmatprep.mubr.f32.mxu0 0.0
      %324 = vmatmul.mubr.f32.gmra.mxu0 %v243
      %v325 = vpop.f32.mrf.mxu0
      %v326 = vadd.f32 0.0, %v325
      %v327 = vpop.f32.mrf.mxu0
      %328 = vmatprep.mubr.f32.mxu0 0.0
      %329 = vmatmul.mubr.f32.gmra.mxu0 %v246
      %v330 = vpop.f32.mrf.mxu0
      %v331 = vadd.f32 0.0, %v330
      %v332 = vpop.f32.mrf.mxu0
      %333 = vmatprep.mubr.f32.mxu0 0.0
      %334 = vmatmul.mubr.f32.gmra.mxu0 %v249
      %v335 = vpop.f32.mrf.mxu0
      %v336 = vadd.f32 0.0, %v335
      %v337 = vpop.f32.mrf.mxu0
      %338 = vmatprep.mubr.f32.mxu0 0.0
      %339 = vmatmul.mubr.f32.gmra.mxu0 %v252
      %v340 = vpop.f32.mrf.mxu0
      %v341 = vadd.f32 0.0, %v340
      %v342 = vpop.f32.mrf.mxu0
      %343 = vdwg.mxu0
      %344 = vmatprep.subr.mxu0 0.0
      %345 = vmatpush1.msra.mxu0 0.0
      %346 = vmatprep.subr.mxu0 0.0
      %347 = vmatpush1.msra.mxu0 0.0
      %348 = vmatprep.subr.mxu0 0.0
      %349 = vmatpush1.msra.mxu0 0.0
      %350 = vmatprep.subr.mxu0 0.0
      %351 = vmatpush1.msra.mxu0 0.0
      %352 = vmatprep.subr.mxu0 0.0
      %353 = vmatpush1.msra.mxu0 0.0
      %354 = vmatprep.subr.mxu0 0.0
      %355 = vmatpush1.msra.mxu0 0.0
      %356 = vmatprep.subr.mxu0 0.0
      %357 = vmatpush1.msra.mxu0 0.0
      %358 = vmatprep.subr.mxu0 0.0
      %359 = vmatpush1.msra.mxu0 0.0
      %360 = vmatprep.subr.mxu0 0.0
      %361 = vmatpush1.msra.mxu0 0.0
      %362 = vmatprep.subr.mxu0 0.0
      %363 = vmatpush1.msra.mxu0 0.0
      %364 = vmatprep.subr.mxu0 0.0
      %365 = vmatpush1.msra.mxu0 0.0
      %366 = vmatprep.subr.mxu0 0.0
      %367 = vmatpush1.msra.mxu0 0.0
      %368 = vmatprep.subr.mxu0 0.0
      %369 = vmatpush1.msra.mxu0 0.0
      %370 = vmatprep.subr.mxu0 0.0
      %371 = vmatpush1.msra.mxu0 0.0
      %372 = vmatprep.subr.mxu0 0.0
      %373 = vmatpush1.msra.mxu0 %v237
      %374 = vmatprep.subr.mxu0 0.0
      %375 = vmatpush1.msra.mxu0 %v236
      %376 = vmatprep.subr.mxu0 0.0
      %377 = vmatpush2.msra.mxu0 0.0
      %378 = vmatprep.subr.mxu0 0.0
      %379 = vmatpush2.msra.mxu0 0.0
      %380 = vmatprep.subr.mxu0 0.0
      %381 = vmatpush2.msra.mxu0 0.0
      %382 = vmatprep.subr.mxu0 0.0
      %383 = vmatpush2.msra.mxu0 0.0
      %384 = vmatprep.subr.mxu0 0.0
      %385 = vmatpush2.msra.mxu0 0.0
      %386 = vmatprep.subr.mxu0 0.0
      %387 = vmatpush2.msra.mxu0 0.0
      %388 = vmatprep.subr.mxu0 0.0
      %389 = vmatpush2.msra.mxu0 0.0
      %390 = vmatprep.subr.mxu0 0.0
      %391 = vmatpush2.msra.mxu0 0.0
      %392 = vmatprep.subr.mxu0 0.0
      %393 = vmatpush2.msra.mxu0 0.0
      %394 = vmatprep.subr.mxu0 0.0
      %395 = vmatpush2.msra.mxu0 0.0
      %396 = vmatprep.subr.mxu0 0.0
      %397 = vmatpush2.msra.mxu0 0.0
      %398 = vmatprep.subr.mxu0 0.0
      %399 = vmatpush2.msra.mxu0 0.0
      %400 = vmatprep.subr.mxu0 0.0
      %401 = vmatpush2.msra.mxu0 0.0
      %402 = vmatprep.subr.mxu0 0.0
      %403 = vmatpush2.msra.mxu0 0.0
      %404 = vmatprep.subr.mxu0 0.0
      %405 = vmatpush2.msra.mxu0 0.0
      %406 = vmatprep.subr.mxu0 0.0
      %407 = vmatpush2.msra.mxu0 0.0
      %408 = vmatprep.mubr.f32.mxu0 0.0
      %409 = vmatmul.mubr.f32.gmra.mxu0 %v240
      %v410 = vpop.f32.mrf.mxu0
      %v411 = vadd.f32 0.0, %v410
      %v412 = vpop.f32.mrf.mxu0
      %413 = vmatprep.mubr.f32.mxu0 0.0
      %414 = vmatmul.mubr.f32.gmra.mxu0 %v243
      %v415 = vpop.f32.mrf.mxu0
      %v416 = vadd.f32 0.0, %v415
      %v417 = vpop.f32.mrf.mxu0
      %418 = vmatprep.mubr.f32.mxu0 0.0
      %419 = vmatmul.mubr.f32.gmra.mxu0 %v246
      %v420 = vpop.f32.mrf.mxu0
      %v421 = vadd.f32 0.0, %v420
      %v422 = vpop.f32.mrf.mxu0
      %423 = vmatprep.mubr.f32.mxu0 0.0
      %424 = vmatmul.mubr.f32.gmra.mxu0 %v249
      %v425 = vpop.f32.mrf.mxu0
      %v426 = vadd.f32 0.0, %v425
      %v427 = vpop.f32.mrf.mxu0
      %428 = vmatprep.mubr.f32.mxu0 0.0
      %429 = vmatmul.mubr.f32.gmra.mxu0 %v252
      %v430 = vpop.f32.mrf.mxu0
      %v431 = vadd.f32 0.0, %v430
      %v432 = vpop.f32.mrf.mxu0
      %433 = vdwg.mxu0
      %v434 = vmul.f32 %v321, %v411
      %v435 = vrot.slane %v434, 4
      %v436 = vadd.f32 %v434, %v435
      %v437 = vrot.slane %v436, 2
      %v438 = vadd.f32 %v436, %v437
      %v439 = vrot.slane %v438, 1
      %v440 = vadd.f32 %v438, %v439
      %v441 = vsub.f32 %v326, %v416
      %v442 = vsub.f32 %v331, %v421
      %v443 = vsub.f32 %v336, %v426
      %v444 = vsub.f32 %v341, %v431
      %v445 = vmul.f32 %v441, %v441
      %v446 = vmul.f32 %v442, %v442
      %v447 = vmul.f32 %v443, %v443
      %v448 = vmul.f32 %v444, %v444
      %v449 = vadd.f32 %v445, %v446
      %v450 = vadd.f32 %v449, %v447
      %v451 = vadd.f32 %v450, %v448
      %v452 = vrot.slane %v451, 4
      %v453 = vadd.f32 %v451, %v452
      %v454 = vrot.slane %v453, 2
      %v455 = vadd.f32 %v453, %v454
      %v456 = vrot.slane %v455, 1
      %v457 = vadd.f32 %v455, %v456
      %v458 = vld [vmem:[#allocation2] sm:$0x1]
      %v459 = vsub.f32 1.0, %v440
      %v460 = vmul.f32 %v459, %v457
      %v461 = vadd.f32 %v458, %v460
      %462 = vst [vmem:[#allocation2] sm:$0x1] %v461
      // Predicated region
      $region37: #{ir_consistency_loss.1} parent=31 // pred_check
        %p463 = pneg %p203
      $region38: #{ir_consistency_loss.1} parent=31 // pred_check_branch
        %465 = sbr.rel (%p463) target = $region40
      $region39: #{ir_consistency_loss.1} parent=31 // pred_region
        %v466 = vld [vmem:[#allocation2] sm:$0x1]
        %vm467 = vcmask 1040384
        %v468 = vsel %vm467, %v466, 0.0
        %469 = vadd.xlane.f32.xlu0 %v468
        %v470 = vpop.xlane.xlu0 %469
        %v471 = vrot.slane %v470, 4
        %v472 = vadd.f32 %v470, %v471
        %v473 = vrot.slane %v472, 2
        %v474 = vadd.f32 %v472, %v473
        %v475 = vrot.slane %v474, 1
        %v476 = vadd.f32 %v474, %v475
        %s477 = vtos %v476
        %v478 = vlaneseq
        %v479 = vand.u32 %v478, 127
        %vm480 = vcmp.eq.s32.totalorder %v216, 0
        %vm481 = vcmp.eq.s32.totalorder %v479, 0
        %vm482 = vmand %vm480, %vm481
        %v483 = vstv %s477
        %v484 = vsel %vm482, %v483, 0.0
        %485 = vst [vmem:[%s202] sm:$0xff] %v484
      $region40: #{ir_consistency_loss.1} parent=31 // pred_fallthru
        _
      %p486 = scmp.lt.s32.totalorder %s18, 1
      %s487 = scalar_select %p486, %s18, 1
      %s488 = smul.addr %s487, 8
      %s489 = scalar_lea.vmem %s3, %s488
      // Predicated region
      $region41: #{ir_consistency_loss.1} parent=31 // pred_check
        %p490 = pneg %p121
      $region42: #{ir_consistency_loss.1} parent=31 // pred_check_branch
        %492 = sbr.rel (%p490) target = $region44
      $region43: #{ir_consistency_loss.1} parent=31 // pred_region
        _
      $region44: #{ir_consistency_loss.1} parent=31 // pred_fallthru
        _
    $region32: #{ir_consistency_loss.1} parent=5 // pred_fallthru
      _
    %p493 = scmp.le.s32.totalorder 2, %s9
    // Predicated region
    $region45: #{ir_consistency_loss.1} parent=5 // pred_check
      %p494 = pneg %p493
    $region46: #{ir_consistency_loss.1} parent=5 // pred_check_branch
      %496 = sbr.rel (%p494) target = $region48
    $region47: #{ir_consistency_loss.1} parent=5 // pred_region
      %s497 = ssub.s32 %s9, 2
      // Predicated region
      $region49: #{ir_consistency_loss.1} parent=47 // pred_check
        %p498 = pneg %p127
      $region50: #{ir_consistency_loss.1} parent=47 // pred_check_branch
        %500 = sbr.rel (%p498) target = $region52
      $region51: #{ir_consistency_loss.1} parent=47 // pred_region
        %p501 = scmp.lt.s32.totalorder %s20, 1
        %s502 = scalar_select %p501, %s20, 1
        %s503 = smul.addr %s502, 8
        %s504 = scalar_lea.vmem %s3, %s503
      $region52: #{ir_consistency_loss.1} parent=47 // pred_fallthru
        _
    $region48: #{ir_consistency_loss.1} parent=5 // pred_fallthru
      _
  $region6: #{ir_consistency_loss.1} parent=0 // loop_footer
    %s13 = sadd.s32 1, %s9
  $region7: #{ir_consistency_loss.1} parent=0 // loop_footer_branch
    %8 = sbr.rel target = $region3
  $region8: #{ir_consistency_loss.1} parent=0 // loop_exit
    _

</llo_original>
